<compile_context>
chip_gen: v7x
topology: tpu7x:2x2x1
jax: 0.10.0
libtpu: 0.0.40
codegen_flags: <defaults>
</compile_context>

<pallas_src>
import functools

import jax
import jax.numpy as jnp
from jax.experimental import pallas as pl
from jax.experimental.pallas import tpu as pltpu


def _round_up(a, m):
    return ((a + m - 1) // m) * m


def _score_net_kernel(x_ref, w1_ref, b1_ref, w2_ref, b2_ref, o_ref):
    # First Linear: [TB, D] @ [D, H] + [1, H]   (accumulate in f32)
    x = x_ref[...]
    h = jnp.dot(x, w1_ref[...], preferred_element_type=jnp.float32) + b1_ref[...]
    # LeakyReLU (negative_slope = 0.01, PyTorch default), in f32.
    h = jnp.where(h >= 0, h, 0.01 * h)
    # Second Linear: [TB, H] @ [H, O_pad] + [1, O_pad]  (lane-dense O_pad = 128k)
    o = jnp.dot(h.astype(w2_ref.dtype), w2_ref[...],
                preferred_element_type=jnp.float32) + b2_ref[...]
    o_ref[...] = o.astype(o_ref.dtype)


@functools.partial(jax.jit, static_argnames=("tb", "compute_dtype"))
def score_net_forward(x, w1, b1, w2, b2, *, tb=8192, compute_dtype=None):
    """x: [B, D]; w1: [D, H]; b1: [1, H]; w2: [H, O]; b2: [1, O]. Returns [B, O] f32.

    tb:            target batch-tile size (rows per grid step), clamped/aligned.
    compute_dtype: if set (e.g. jnp.bfloat16), x/w1/w2 are streamed in that dtype
                   (halves HBM bytes); accumulation and activation stay in f32.
    """
    B, D = x.shape
    H = w1.shape[1]
    O = w2.shape[1]

    if compute_dtype is not None:
        x = x.astype(compute_dtype)
        w1 = w1.astype(compute_dtype)
        w2 = w2.astype(compute_dtype)
    b1 = b1.astype(jnp.float32)
    b2 = b2.astype(jnp.float32)

    # Lane-dense output: zero-pad the second layer to a multiple of 128 columns
    # so the output store is a full-width (unmasked) vector store.
    O_pad = 128 * pl.cdiv(O, 128)
    if O_pad != O:
        w2 = jnp.pad(w2, ((0, 0), (0, O_pad - O)))
        b2 = jnp.pad(b2, ((0, 0), (0, O_pad - O)))

    # Batch tiling: tile size must be a multiple of 8 (sublane rule); pad B so
    # the tile divides it evenly, then slice the padding off at the end.
    tb_eff = min(_round_up(tb, 8), _round_up(B, 8))
    B_pad = _round_up(B, tb_eff)
    if B_pad != B:
        x = jnp.pad(x, ((0, B_pad - B), (0, 0)))
    grid = (B_pad // tb_eff,)

    bytes_per_x = jnp.dtype(x.dtype).itemsize
    cost = pl.CostEstimate(
        flops=2 * B_pad * (D * H + H * O_pad),
        transcendentals=0,
        bytes_accessed=(B_pad * D * bytes_per_x            # stream x
                        + B_pad * O_pad * 4                # write output
                        + (D * H + H * O_pad) * bytes_per_x
                        + (H + O_pad) * 4),                # weights/biases (once)
    )

    out = pl.pallas_call(
        _score_net_kernel,
        out_shape=jax.ShapeDtypeStruct((B_pad, O_pad), jnp.float32),
        grid=grid,
        in_specs=[
            pl.BlockSpec((tb_eff, D), lambda i: (i, 0)),    # x: tiled over batch
            pl.BlockSpec((D, H), lambda i: (0, 0)),         # w1: VMEM-resident
            pl.BlockSpec((1, H), lambda i: (0, 0)),         # b1: VMEM-resident
            pl.BlockSpec((H, O_pad), lambda i: (0, 0)),     # w2: VMEM-resident
            pl.BlockSpec((1, O_pad), lambda i: (0, 0)),     # b2: VMEM-resident
        ],
        out_specs=pl.BlockSpec((tb_eff, O_pad), lambda i: (i, 0)),
        compiler_params=pltpu.CompilerParams(
            dimension_semantics=("parallel",),
            vmem_limit_bytes=32 * 1024 * 1024,
        ),
        cost_estimate=cost,
    )(x, w1, b1, w2, b2)

    return out[:B, :O]


def init_linear_params(key, fan_in, fan_out):
    """PyTorch-style nn.Linear init: U(-1/sqrt(fan_in), 1/sqrt(fan_in)).
    Returns (weight [fan_in, fan_out], bias [1, fan_out])."""
    kw, kb = jax.random.split(key)
    bound = 1.0 / jnp.sqrt(jnp.float32(fan_in))
    w = jax.random.uniform(kw, (fan_in, fan_out), jnp.float32, -bound, bound)
    b = jax.random.uniform(kb, (1, fan_out), jnp.float32, -bound, bound)
    return w, b


class NetworkPallas:
    """JAX/Pallas port of `Network`. forward() (score_net) runs on TPU via Pallas."""

    def __init__(self, K, F, key):
        self.K = K
        self.F = F
        D = (F + 2) * (K + 1)
        H = 16
        O = K + 1
        k1, k2 = jax.random.split(key)
        self.w1, self.b1 = init_linear_params(k1, D, H)
        self.w2, self.b2 = init_linear_params(k2, H, O)

    def forward(self, x, *, tb=8192, compute_dtype=None):
        # x: [B, (F+2)*(K+1)]
        return score_net_forward(x, self.w1, self.b1, self.w2, self.b2,
                                 tb=tb, compute_dtype=compute_dtype)


def _reference(x, net):
    h = x @ net.w1 + net.b1
    h = jnp.where(h >= 0, h, 0.01 * h)
    return h @ net.w2 + net.b2


if __name__ == "__main__":
    K, F = 4, 2          # D = (F+2)*(K+1) = 20, output K+1 = 5
    D = (F + 2) * (K + 1)

    key = jax.random.PRNGKey(0)
    k_param, k_x1, k_x2 = jax.random.split(key, 3)
    net = NetworkPallas(K, F, k_param)

    # --- Test 1: small batch, f32, single tile ---
    B = 8
    x = jax.random.normal(k_x1, (B, D), dtype=jnp.float32)
    out = jax.block_until_ready(net.forward(x))
    ref = _reference(x, net)
    assert out.shape == (B, K + 1)
    assert jnp.allclose(out, ref, atol=1e-5, rtol=1e-5), "f32 mismatch"

    # --- Test 2: ragged batch (not a multiple of 8) + multi-tile grid, f32 ---
    B2 = 37
    x2 = jax.random.normal(k_x2, (B2, D), dtype=jnp.float32)
    out2 = jax.block_until_ready(net.forward(x2, tb=16))
    ref2 = _reference(x2, net)
    assert out2.shape == (B2, K + 1)
    assert jnp.allclose(out2, ref2, atol=1e-5, rtol=1e-5), "tiled f32 mismatch"

    # --- Test 3: bf16 streaming path (HBM-bytes halving), looser tolerance ---
    out3 = jax.block_until_ready(net.forward(x2, tb=16, compute_dtype=jnp.bfloat16))
    assert out3.shape == (B2, K + 1)
    assert jnp.allclose(out3, ref2, atol=5e-2, rtol=5e-2), "bf16 mismatch"

    print("KERNEL_OK")
</pallas_src>

<mosaic_0001>
module attributes {stable_mosaic.version = 11 : i64} {
  func.func @_score_net_kernel(%arg0: i32, %arg1: memref<8x20xf32, #tpu.memory_space<vmem>>, %arg2: memref<20x16xf32, #tpu.memory_space<vmem>>, %arg3: memref<1x16xf32, #tpu.memory_space<vmem>>, %arg4: memref<16x128xf32, #tpu.memory_space<vmem>>, %arg5: memref<1x128xf32, #tpu.memory_space<vmem>>, %arg6: memref<8x128xf32, #tpu.memory_space<vmem>>) attributes {dimension_semantics = [#tpu.dimension_semantics<parallel>], iteration_bounds = array<i64: 1>, scalar_prefetch = 0 : i64, scratch_operands = 0 : i64, tpu.core_type = #tpu.core_type<tc>, window_params = [{transform_indices = @transform_0, window_bounds = array<i64: 8, 20>}, {pipeline_mode = #tpu.pipeline_mode<synchronous>, transform_indices = @transform_1, window_bounds = array<i64: 20, 16>}, {pipeline_mode = #tpu.pipeline_mode<synchronous>, transform_indices = @transform_2, window_bounds = array<i64: 1, 16>}, {pipeline_mode = #tpu.pipeline_mode<synchronous>, transform_indices = @transform_3, window_bounds = array<i64: 16, 128>}, {pipeline_mode = #tpu.pipeline_mode<synchronous>, transform_indices = @transform_4, window_bounds = array<i64: 1, 128>}, {transform_indices = @transform_5, window_bounds = array<i64: 8, 128>}]} {
    %c0 = arith.constant 0 : index
    %c0_0 = arith.constant 0 : index
    %0 = vector.load %arg1[%c0, %c0_0] : memref<8x20xf32, #tpu.memory_space<vmem>>, vector<8x20xf32>
    %c0_1 = arith.constant 0 : index
    %c0_2 = arith.constant 0 : index
    %1 = vector.load %arg2[%c0_1, %c0_2] : memref<20x16xf32, #tpu.memory_space<vmem>>, vector<20x16xf32>
    %cst = arith.constant dense<0.000000e+00> : vector<8x16xf32>
    %2 = tpu.matmul %0, %1, %cst {dimension_numbers = #tpu.dot_dimension_numbers<[1], [0], [0], [1], [0, 0, 1, 1], [], []>} : vector<8x20xf32>, vector<20x16xf32>, vector<8x16xf32> -> vector<8x16xf32>
    %c0_3 = arith.constant 0 : index
    %c0_4 = arith.constant 0 : index
    %3 = vector.load %arg3[%c0_3, %c0_4] : memref<1x16xf32, #tpu.memory_space<vmem>>, vector<1x16xf32>
    %4 = vector.broadcast %3 : vector<1x16xf32> to vector<8x16xf32>
    %5 = arith.addf %2, %4 : vector<8x16xf32>
    %cst_5 = arith.constant 0.000000e+00 : f32
    %6 = vector.broadcast %cst_5 : f32 to vector<8x16xf32>
    %7 = arith.cmpf oge, %5, %6 : vector<8x16xf32>
    %cst_6 = arith.constant 0.00999999977 : f32
    %8 = vector.broadcast %cst_6 : f32 to vector<8x16xf32>
    %9 = arith.mulf %8, %5 : vector<8x16xf32>
    %10 = arith.select %7, %5, %9 : vector<8x16xi1>, vector<8x16xf32>
    %c0_7 = arith.constant 0 : index
    %c0_8 = arith.constant 0 : index
    %11 = vector.load %arg4[%c0_7, %c0_8] : memref<16x128xf32, #tpu.memory_space<vmem>>, vector<16x128xf32>
    %cst_9 = arith.constant dense<0.000000e+00> : vector<8x128xf32>
    %12 = tpu.matmul %10, %11, %cst_9 {dimension_numbers = #tpu.dot_dimension_numbers<[1], [0], [0], [1], [0, 0, 1, 1], [], []>} : vector<8x16xf32>, vector<16x128xf32>, vector<8x128xf32> -> vector<8x128xf32>
    %c0_10 = arith.constant 0 : index
    %c0_11 = arith.constant 0 : index
    %13 = vector.load %arg5[%c0_10, %c0_11] : memref<1x128xf32, #tpu.memory_space<vmem>>, vector<1x128xf32>
    %14 = vector.broadcast %13 : vector<1x128xf32> to vector<8x128xf32>
    %15 = arith.addf %12, %14 : vector<8x128xf32>
    %c0_12 = arith.constant 0 : index
    %c0_13 = arith.constant 0 : index
    %16 = vector.load %arg6[%c0_12, %c0_13] : memref<8x128xf32, #tpu.memory_space<vmem>>, vector<8x128xf32>
    tpu.vector_store %arg6[%c0_12, %c0_13], %15 {strides = array<i32>} : memref<8x128xf32, #tpu.memory_space<vmem>>, vector<8x128xf32>,
    return
  }
  func.func @transform_0(%arg0: i32) -> (i32, i32) {
    %c0_i32 = arith.constant 0 : i32
    %c0_i32_0 = arith.constant 0 : i32
    return %arg0, %c0_i32 : i32, i32
  }
  func.func @transform_1(%arg0: i32) -> (i32, i32) {
    %c0_i32 = arith.constant 0 : i32
    %c0_i32_0 = arith.constant 0 : i32
    %c0_i32_1 = arith.constant 0 : i32
    return %c0_i32, %c0_i32_0 : i32, i32
  }
  func.func @transform_2(%arg0: i32) -> (i32, i32) {
    %c0_i32 = arith.constant 0 : i32
    %c0_i32_0 = arith.constant 0 : i32
    %c0_i32_1 = arith.constant 0 : i32
    return %c0_i32, %c0_i32_0 : i32, i32
  }
  func.func @transform_3(%arg0: i32) -> (i32, i32) {
    %c0_i32 = arith.constant 0 : i32
    %c0_i32_0 = arith.constant 0 : i32
    %c0_i32_1 = arith.constant 0 : i32
    return %c0_i32, %c0_i32_0 : i32, i32
  }
  func.func @transform_4(%arg0: i32) -> (i32, i32) {
    %c0_i32 = arith.constant 0 : i32
    %c0_i32_0 = arith.constant 0 : i32
    %c0_i32_1 = arith.constant 0 : i32
    return %c0_i32, %c0_i32_0 : i32, i32
  }
  func.func @transform_5(%arg0: i32) -> (i32, i32) {
    %c0_i32 = arith.constant 0 : i32
    %c0_i32_0 = arith.constant 0 : i32
    return %arg0, %c0_i32 : i32, i32
  }
}

</mosaic_0001>

<llo_original>
// kernel: score_net_forward.1
$region0: #{score_net_forward.1}
  #allocation0 [shape = 'u32[]', space=smem, size = 0x4, offset = 0x4, fixed_abs, tag = 'smem constant byte address 0x4 - core index']
  #allocation1 [shape = 'u32[144,128]{1,0:T(1,128)}', space=vmem, size = 0x12000, scoped, tag = 'internal scratch']
  %s0 = inlined_call_operand.vmem [shape: f32[8,20], index: 0, kind: input, shape index: {}]
  %s1 = inlined_call_operand.vmem [shape: f32[20,16], index: 1, kind: input, shape index: {}]
  %s2 = inlined_call_operand.vmem [shape: f32[1,16], index: 2, kind: input, shape index: {}]
  %s3 = inlined_call_operand.vmem [shape: f32[16,128], index: 3, kind: input, shape index: {}]
  %s4 = inlined_call_operand.vmem [shape: f32[1,128], index: 4, kind: input, shape index: {}]
  %s5 = inlined_call_operand.hbm [shape: f32[8,128], index: 5, kind: output, shape index: {}]
  %s6 = sld [smem:[#allocation0]]
  $region30: #{score_net_forward.1} parent=0
    _
  %s8 = ssub.s32 1, %s6
  %s9 = scalar_select 0, %s8, %s6
  $region1: #{score_net_forward.1} parent=0
    #allocation2 [shape = 'u8[4096]{0}', space=vmem, size = 0x1000, scoped, tag = 'output window, operand 0, single buffered']
    #allocation3 [shape = 's32[1]{0}', space=sflag, size = 0x4, scoped, tag = 'scoped memory for score_net_forward.1']
    %10 = vsyncpa [#allocation3], 0
    // Predicated region
    $region2: #{score_net_forward.1} parent=1 // pred_check
      _
    $region3: #{score_net_forward.1} parent=1 // pred_check_branch
      %12 = sbr.rel (0) target = $region5
    $region4: #{score_net_forward.1} parent=1 // pred_region
      _
    $region5: #{score_net_forward.1} parent=1 // pred_fallthru
      _
    // Predicated region
    $region6: #{score_net_forward.1} parent=1 // pred_check
      _
    $region7: #{score_net_forward.1} parent=1 // pred_check_branch
      %14 = sbr.rel (0) target = $region9
    $region8: #{score_net_forward.1} parent=1 // pred_region
      _
    $region9: #{score_net_forward.1} parent=1 // pred_fallthru
      _
    // Predicated region
    $region10: #{score_net_forward.1} parent=1 // pred_check
      _
    $region11: #{score_net_forward.1} parent=1 // pred_check_branch
      %16 = sbr.rel (0) target = $region13
    $region12: #{score_net_forward.1} parent=1 // pred_region
      _
    $region13: #{score_net_forward.1} parent=1 // pred_fallthru
      _
    // Predicated region
    $region14: #{score_net_forward.1} parent=1 // pred_check
      _
    $region15: #{score_net_forward.1} parent=1 // pred_check_branch
      %18 = sbr.rel (0) target = $region17
    $region16: #{score_net_forward.1} parent=1 // pred_region
      _
    $region17: #{score_net_forward.1} parent=1 // pred_fallthru
      _
    // Predicated region
    $region18: #{score_net_forward.1} parent=1 // pred_check
      _
    $region19: #{score_net_forward.1} parent=1 // pred_check_branch
      %20 = sbr.rel (0) target = $region21
    $region20: #{score_net_forward.1} parent=1 // pred_region
      _
    $region21: #{score_net_forward.1} parent=1 // pred_fallthru
      _
    %v21 = vld [vmem:[%s0] sm:$0xff]
    %v22 = vld [vmem:[%s1] sm:$0xff]
    %v23 = vld [vmem:[%s1 + $0x8] sm:$0xff]
    %v24 = vld [vmem:[%s1 + $0x10] sm:$0xf]
    %v25 = vld [vmem:[%s2] sm:$0x1]
    %v27 = vlaneseq
    %v28 = vshrl.u32 %v27, 7
    %v29 = vsub.s32 0, %v28
    %v30 = vrot.slane %v25, %v29
    %vm32 = vcmask 162816
    %v34 = vsel %vm32, %v21, 0
    %vm36 = vcmask 1043456
    %v38 = vsel %vm36, %v24, 0
    %40 = vmatprep.subr.mxu0 0.0
    %41 = vmatpush1.msra.mxu0 %v22
    %42 = vmatprep.subr.mxu0 0.0
    %43 = vmatpush1.msra.mxu0 %v23
    %44 = vmatprep.subr.mxu0 0.0
    %45 = vmatpush1.msra.mxu0 %v38
    %46 = vmatprep.subr.mxu0 0.0
    %47 = vmatpush1.msra.mxu0 0.0
    %48 = vmatprep.subr.mxu0 0.0
    %49 = vmatpush1.msra.mxu0 0.0
    %50 = vmatprep.subr.mxu0 0.0
    %51 = vmatpush1.msra.mxu0 0.0
    %52 = vmatprep.subr.mxu0 0.0
    %53 = vmatpush1.msra.mxu0 0.0
    %54 = vmatprep.subr.mxu0 0.0
    %55 = vmatpush1.msra.mxu0 0.0
    %56 = vmatprep.subr.mxu0 0.0
    %57 = vmatpush1.msra.mxu0 0.0
    %58 = vmatprep.subr.mxu0 0.0
    %59 = vmatpush1.msra.mxu0 0.0
    %60 = vmatprep.subr.mxu0 0.0
    %61 = vmatpush1.msra.mxu0 0.0
    %62 = vmatprep.subr.mxu0 0.0
    %63 = vmatpush1.msra.mxu0 0.0
    %64 = vmatprep.subr.mxu0 0.0
    %65 = vmatpush1.msra.mxu0 0.0
    %66 = vmatprep.subr.mxu0 0.0
    %67 = vmatpush1.msra.mxu0 0.0
    %68 = vmatprep.subr.mxu0 0.0
    %69 = vmatpush1.msra.mxu0 0.0
    %70 = vmatprep.subr.mxu0 0.0
    %71 = vmatpush1.msra.mxu0 0.0
    %72 = vmatprep.subr.mxu0 0.0
    %73 = vmatpush1.msra.mxu0 0.0
    %74 = vmatprep.subr.mxu0 0.0
    %75 = vmatpush1.msra.mxu0 0.0
    %76 = vmatprep.subr.mxu0 0.0
    %77 = vmatpush1.msra.mxu0 0.0
    %78 = vmatprep.subr.mxu0 0.0
    %79 = vmatpush1.msra.mxu0 0.0
    %80 = vmatprep.subr.mxu0 0.0
    %81 = vmatpush1.msra.mxu0 0.0
    %82 = vmatprep.subr.mxu0 0.0
    %83 = vmatpush1.msra.mxu0 0.0
    %84 = vmatprep.subr.mxu0 0.0
    %85 = vmatpush1.msra.mxu0 0.0
    %86 = vmatprep.subr.mxu0 0.0
    %87 = vmatpush1.msra.mxu0 0.0
    %88 = vmatprep.subr.mxu0 0.0
    %89 = vmatpush1.msra.mxu0 0.0
    %90 = vmatprep.subr.mxu0 0.0
    %91 = vmatpush1.msra.mxu0 0.0
    %92 = vmatprep.subr.mxu0 0.0
    %93 = vmatpush1.msra.mxu0 0.0
    %94 = vmatprep.subr.mxu0 0.0
    %95 = vmatpush1.msra.mxu0 0.0
    %96 = vmatprep.subr.mxu0 0.0
    %97 = vmatpush1.msra.mxu0 0.0
    %98 = vmatprep.subr.mxu0 0.0
    %99 = vmatpush1.msra.mxu0 0.0
    %100 = vmatprep.subr.mxu0 0.0
    %101 = vmatpush1.msra.mxu0 0.0
    %102 = vmatprep.subr.mxu0 0.0
    %103 = vmatpush1.msra.mxu0 0.0
    %104 = vmatprep.mubr.f32.mxu0 0.0
    %105 = vmatmul.mubr.f32.gmra.mrb[0].mxu0 %v34
    %v106 = vpop.f32.mrb[0].mxu0
    %v107 = vadd.f32 %v30, %v106
    %v108 = vpop.f32.mrb[0].mxu0
    %109 = vdwg.mxu0
    %vm110 = vcmp.ge.f32.partialorder %v107, 0.0
    %v111 = vmul.f32 %v107, 0.01
    %v112 = vsel %vm110, %v107, %v111
    %v113 = vld [vmem:[%s3] sm:$0xff]
    %v114 = vld [vmem:[%s3 + $0x8] sm:$0xff]
    %v115 = vld [vmem:[%s4] sm:$0x1]
    %v117 = vlaneseq
    %v118 = vshrl.u32 %v117, 7
    %v119 = vsub.s32 0, %v118
    %v120 = vrot.slane %v115, %v119
    %vm122 = vcmask 130048
    %v124 = vsel %vm122, %v112, 0
    %126 = vmatprep.subr.mxu0 0.0
    %127 = vmatpush1.msra.mxu0 %v113
    %128 = vmatprep.subr.mxu0 0.0
    %129 = vmatpush1.msra.mxu0 %v114
    %130 = vmatprep.subr.mxu0 0.0
    %131 = vmatpush1.msra.mxu0 0.0
    %132 = vmatprep.subr.mxu0 0.0
    %133 = vmatpush1.msra.mxu0 0.0
    %134 = vmatprep.subr.mxu0 0.0
    %135 = vmatpush1.msra.mxu0 0.0
    %136 = vmatprep.subr.mxu0 0.0
    %137 = vmatpush1.msra.mxu0 0.0
    %138 = vmatprep.subr.mxu0 0.0
    %139 = vmatpush1.msra.mxu0 0.0
    %140 = vmatprep.subr.mxu0 0.0
    %141 = vmatpush1.msra.mxu0 0.0
    %142 = vmatprep.subr.mxu0 0.0
    %143 = vmatpush1.msra.mxu0 0.0
    %144 = vmatprep.subr.mxu0 0.0
    %145 = vmatpush1.msra.mxu0 0.0
    %146 = vmatprep.subr.mxu0 0.0
    %147 = vmatpush1.msra.mxu0 0.0
    %148 = vmatprep.subr.mxu0 0.0
    %149 = vmatpush1.msra.mxu0 0.0
    %150 = vmatprep.subr.mxu0 0.0
    %151 = vmatpush1.msra.mxu0 0.0
    %152 = vmatprep.subr.mxu0 0.0
    %153 = vmatpush1.msra.mxu0 0.0
    %154 = vmatprep.subr.mxu0 0.0
    %155 = vmatpush1.msra.mxu0 0.0
    %156 = vmatprep.subr.mxu0 0.0
    %157 = vmatpush1.msra.mxu0 0.0
    %158 = vmatprep.subr.mxu0 0.0
    %159 = vmatpush1.msra.mxu0 0.0
    %160 = vmatprep.subr.mxu0 0.0
    %161 = vmatpush1.msra.mxu0 0.0
    %162 = vmatprep.subr.mxu0 0.0
    %163 = vmatpush1.msra.mxu0 0.0
    %164 = vmatprep.subr.mxu0 0.0
    %165 = vmatpush1.msra.mxu0 0.0
    %166 = vmatprep.subr.mxu0 0.0
    %167 = vmatpush1.msra.mxu0 0.0
    %168 = vmatprep.subr.mxu0 0.0
    %169 = vmatpush1.msra.mxu0 0.0
    %170 = vmatprep.subr.mxu0 0.0
    %171 = vmatpush1.msra.mxu0 0.0
    %172 = vmatprep.subr.mxu0 0.0
    %173 = vmatpush1.msra.mxu0 0.0
    %174 = vmatprep.subr.mxu0 0.0
    %175 = vmatpush1.msra.mxu0 0.0
    %176 = vmatprep.subr.mxu0 0.0
    %177 = vmatpush1.msra.mxu0 0.0
    %178 = vmatprep.subr.mxu0 0.0
    %179 = vmatpush1.msra.mxu0 0.0
    %180 = vmatprep.subr.mxu0 0.0
    %181 = vmatpush1.msra.mxu0 0.0
    %182 = vmatprep.subr.mxu0 0.0
    %183 = vmatpush1.msra.mxu0 0.0
    %184 = vmatprep.subr.mxu0 0.0
    %185 = vmatpush1.msra.mxu0 0.0
    %186 = vmatprep.subr.mxu0 0.0
    %187 = vmatpush1.msra.mxu0 0.0
    %188 = vmatprep.subr.mxu0 0.0
    %189 = vmatpush1.msra.mxu0 0.0
    %190 = vmatprep.mubr.f32.mxu0 0.0
    %191 = vmatmul.mubr.f32.gmra.mrb[0].mxu0 %v124
    %v192 = vpop.f32.mrb[0].mxu0
    %v193 = vadd.f32 %v120, %v192
    %v194 = vpop.f32.mrb[0].mxu0
    %195 = vdwg.mxu0
    %196 = vst [vmem:[#allocation2] sm:$0xff] %v193
    // Predicated region
    $region22: #{score_net_forward.1} parent=1 // pred_check
      _
    $region23: #{score_net_forward.1} parent=1 // pred_check_branch
      %198 = sbr.rel (0) target = $region25
    $region24: #{score_net_forward.1} parent=1 // pred_region
      %s200 = ssub.s32 128, 128
      %201 = vsyncadd [#allocation3], %s200
      %s203 = sshll.u32 [#allocation2], 4
      %s204 = int_to_ptr.vmem [resolvable:$true] %s203
      %206 = dma.vmem_to_hbm [thread:$0]  %s204, 128, %s5, [#allocation3]
    $region25: #{score_net_forward.1} parent=1 // pred_fallthru
      _
    // Predicated region
    $region26: #{score_net_forward.1} parent=1 // pred_check
      _
    $region27: #{score_net_forward.1} parent=1 // pred_check_branch
      %208 = sbr.rel (0) target = $region29
    $region28: #{score_net_forward.1} parent=1 // pred_region
      %209 = dma.done [#allocation3], 128
    $region29: #{score_net_forward.1} parent=1 // pred_fallthru
      _
    %210 = vsyncpa [#allocation3], 1

</llo_original>
